<compile_context>
chip_gen: v7x
topology: tpu7x:2x2x1
jax: 0.10.0
libtpu: 0.0.40
codegen_flags: <defaults>
</compile_context>

<pallas_src>
import jax
import jax.numpy as jnp
from jax.experimental import pallas as pl
from jax.experimental.pallas import tpu as pltpu


def _identity_decode_kernel(feat_ref, enc_ref, feat_out_ref, enc_out_ref):
    # TODO(synk): BaseDecoder.forward_train / forward_test raise
    # NotImplementedError in the reference; the base class defines no compute.
    # This fused identity body is only the hook point where subclasses drop
    # their real decode compute (attention / LSTM decode over feat + out_enc).
    feat_out_ref[...] = feat_ref[...]
    enc_out_ref[...] = enc_ref[...]


@jax.jit
def _fused_identity_decode(feat, out_enc):
    """Single fused pallas_call: both tensors in, both out, full-array blocks.

    SAR-sized feat/out_enc are KB-scale, so whole-array VMEM residency is far
    below the scoped-VMEM defaults on v5e (16 MiB) / v6e (32 MiB) / v7x
    (32 MiB).  Larger subclass inputs should introduce a cdiv-tiled grid here.
    """
    vmem = pltpu.MemorySpace.VMEM
    return pl.pallas_call(
        _identity_decode_kernel,
        out_shape=(
            jax.ShapeDtypeStruct(feat.shape, feat.dtype),
            jax.ShapeDtypeStruct(out_enc.shape, out_enc.dtype),
        ),
        in_specs=[
            pl.BlockSpec(memory_space=vmem),
            pl.BlockSpec(memory_space=vmem),
        ],
        out_specs=(
            pl.BlockSpec(memory_space=vmem),
            pl.BlockSpec(memory_space=vmem),
        ),
    )(feat, out_enc)


class BaseDecoder:
    """JAX/Pallas port of pytorchocr BaseDecoder (abstract SAR decoder base).

    run_identity_kernel=False (default): true no-op pass-through (zero cost).
    run_identity_kernel=True: route through the fused Pallas identity kernel,
    which is the template/hook subclasses replace with real decode compute.
    """

    def __init__(self, run_identity_kernel=False, **kwargs):
        # Reference __init__ creates no parameters.
        self.run_identity_kernel = run_identity_kernel

    # --- abstract-in-reference paths ---------------------------------------
    def forward_train(self, feat, out_enc, targets, img_metas):
        # targets / img_metas are unused by the base class; no DMA is issued
        # for them.
        if self.run_identity_kernel:
            return _fused_identity_decode(feat, out_enc)
        return feat, out_enc  # true no-op: no kernel, no copies

    def forward_test(self, feat, out_enc, img_metas):
        if self.run_identity_kernel:
            return _fused_identity_decode(feat, out_enc)
        return feat, out_enc  # true no-op: no kernel, no copies

    # --- exact dispatch semantics of the reference forward() ---------------
    def forward(self, feat, out_enc, label=None, img_metas=None, train_mode=True):
        self.train_mode = train_mode
        if train_mode:
            return self.forward_train(feat, out_enc, label, img_metas)
        return self.forward_test(feat, out_enc, img_metas)

    __call__ = forward


if __name__ == "__main__":
    key = jax.random.PRNGKey(0)
    k_feat, k_enc, k_lab = jax.random.split(key, 3)

    # Small shapes consistent with a SAR-style decoder:
    #   feat:    backbone feature map, NCHW  -> (2, 4, 16, 16)
    #   out_enc: holistic encoder feature    -> (2, 32)
    #   label:   target token ids (seq=8)    -> (2, 8)   (unused by base class)
    feat = jax.random.normal(k_feat, (2, 4, 16, 16), dtype=jnp.float32)
    out_enc = jax.random.normal(k_enc, (2, 32), dtype=jnp.float32)
    label = jax.random.randint(k_lab, (2, 8), 0, 37, dtype=jnp.int32)

    # 1) Default base-class path: true no-op (no kernel launch at all).
    base = BaseDecoder()
    f_tr, e_tr = base(feat, out_enc, label=label, img_metas=None, train_mode=True)
    f_te, e_te = base(feat, out_enc, label=None, img_metas=None, train_mode=False)
    jax.block_until_ready((f_tr, e_tr, f_te, e_te))
    assert f_tr.shape == feat.shape and e_tr.shape == out_enc.shape
    assert bool(jnp.allclose(f_tr, feat)) and bool(jnp.allclose(e_tr, out_enc))
    assert bool(jnp.allclose(f_te, feat)) and bool(jnp.allclose(e_te, out_enc))

    # 2) Opt-in Pallas hook path: run the fused identity kernel once on TPU.
    pallas_decoder = BaseDecoder(run_identity_kernel=True)
    f_k, e_k = pallas_decoder(feat, out_enc, label=label, img_metas=None,
                              train_mode=True)
    jax.block_until_ready((f_k, e_k))
    assert f_k.shape == feat.shape and e_k.shape == out_enc.shape
    assert bool(jnp.allclose(f_k, feat)) and bool(jnp.allclose(e_k, out_enc))

    f_k2, e_k2 = pallas_decoder(feat, out_enc, label=None, img_metas=None,
                                train_mode=False)
    jax.block_until_ready((f_k2, e_k2))
    assert bool(jnp.allclose(f_k2, feat)) and bool(jnp.allclose(e_k2, out_enc))

    print("KERNEL_OK")
</pallas_src>

<mosaic_0001>
module attributes {stable_mosaic.version = 11 : i64} {
  func.func @_identity_decode_kernel(%arg0: memref<2x4x16x16xf32, #tpu.memory_space<vmem>>, %arg1: memref<2x32xf32, #tpu.memory_space<vmem>>, %arg2: memref<2x4x16x16xf32, #tpu.memory_space<vmem>>, %arg3: memref<2x32xf32, #tpu.memory_space<vmem>>) attributes {dimension_semantics = [], scalar_prefetch = 0 : i64, scratch_operands = 0 : i64, tpu.core_type = #tpu.core_type<tc>} {
    %c0 = arith.constant 0 : index
    %c0_0 = arith.constant 0 : index
    %c0_1 = arith.constant 0 : index
    %c0_2 = arith.constant 0 : index
    %0 = vector.load %arg0[%c0, %c0_0, %c0_1, %c0_2] : memref<2x4x16x16xf32, #tpu.memory_space<vmem>>, vector<2x4x16x16xf32>
    %c0_3 = arith.constant 0 : index
    %c0_4 = arith.constant 0 : index
    %c0_5 = arith.constant 0 : index
    %c0_6 = arith.constant 0 : index
    %1 = vector.load %arg2[%c0_3, %c0_4, %c0_5, %c0_6] : memref<2x4x16x16xf32, #tpu.memory_space<vmem>>, vector<2x4x16x16xf32>
    tpu.vector_store %arg2[%c0_3, %c0_4, %c0_5, %c0_6], %0 {strides = array<i32>} : memref<2x4x16x16xf32, #tpu.memory_space<vmem>>, vector<2x4x16x16xf32>,
    %c0_7 = arith.constant 0 : index
    %c0_8 = arith.constant 0 : index
    %2 = vector.load %arg1[%c0_7, %c0_8] : memref<2x32xf32, #tpu.memory_space<vmem>>, vector<2x32xf32>
    %c0_9 = arith.constant 0 : index
    %c0_10 = arith.constant 0 : index
    %3 = vector.load %arg3[%c0_9, %c0_10] : memref<2x32xf32, #tpu.memory_space<vmem>>, vector<2x32xf32>
    tpu.vector_store %arg3[%c0_9, %c0_10], %2 {strides = array<i32>} : memref<2x32xf32, #tpu.memory_space<vmem>>, vector<2x32xf32>,
    return
  }
}

</mosaic_0001>

<llo_original>
// kernel: _fused_identity_decode.1
$region0: #{_fused_identity_decode.1}
  #allocation0 [shape = 'u32[]', space=smem, size = 0x4, offset = 0x4, fixed_abs, tag = 'smem constant byte address 0x4 - core index']
  #allocation1 [shape = 'u32[144,128]{1,0:T(1,128)}', space=vmem, size = 0x12000, scoped, tag = 'internal scratch']
  %s0 = inlined_call_operand.hbm [shape: f32[2,4,16,16], index: 0, kind: input, shape index: {}]
  %s1 = inlined_call_operand.vmem [shape: f32[2,32], index: 1, kind: input, shape index: {}]
  %s2 = inlined_call_operand.hbm [shape: f32[2,4,16,16], index: 2, kind: output, shape index: {0}]
  %s3 = inlined_call_operand.hbm [shape: f32[2,32], index: 3, kind: output, shape index: {1}]
  %4 = xla_tuple %s2, %s3
  %s5 = sld [smem:[#allocation0]]
  $region30: #{_fused_identity_decode.1} parent=0
    _
  %s7 = ssub.s32 1, %s5
  %s8 = scalar_select 0, %s7, %s5
  $region1: #{_fused_identity_decode.1} parent=0
    #allocation2 [shape = 'u8[65536]{0}', space=vmem, size = 0x10000, scoped, tag = 'input window, operand 0, single buffered']
    #allocation3 [shape = 's32[1]{0}', space=sflag, size = 0x4, scoped, tag = 'scoped memory for _fused_identity_decode.1']
    #allocation4 [shape = 's32[1]{0}', space=sflag, size = 0x4, scoped, tag = 'scoped memory for _fused_identity_decode.1']
    #allocation5 [shape = 'u8[65536]{0}', space=vmem, size = 0x10000, scoped, tag = 'output window, operand 0, single buffered']
    #allocation6 [shape = 'u8[1024]{0}', space=vmem, size = 0x400, scoped, tag = 'output window, operand 1, single buffered']
    #allocation7 [shape = 's32[1]{0}', space=sflag, size = 0x4, scoped, tag = 'scoped memory for _fused_identity_decode.1']
    %9 = vsyncpa [#allocation3], 0
    %10 = vsyncpa [#allocation4], 0
    %11 = vsyncpa [#allocation7], 0
    // Predicated region
    $region2: #{_fused_identity_decode.1} parent=1 // pred_check
      _
    $region3: #{_fused_identity_decode.1} parent=1 // pred_check_branch
      %13 = sbr.rel (0) target = $region5
    $region4: #{_fused_identity_decode.1} parent=1 // pred_region
      %s15 = ssub.s32 2048, 2048
      %16 = vsyncadd [#allocation3], %s15
      %s17 = sshll.u32 [#allocation2], 4
      %s18 = int_to_ptr.vmem [resolvable:$true] %s17
      %23 = dma.hbm_to_vmem [thread:$0]  %s0, 2048, %s18, [#allocation3], 128, 128, 8
    $region5: #{_fused_identity_decode.1} parent=1 // pred_fallthru
      _
    // Predicated region
    $region6: #{_fused_identity_decode.1} parent=1 // pred_check
      _
    $region7: #{_fused_identity_decode.1} parent=1 // pred_check_branch
      %25 = sbr.rel (0) target = $region9
    $region8: #{_fused_identity_decode.1} parent=1 // pred_region
      _
    $region9: #{_fused_identity_decode.1} parent=1 // pred_fallthru
      _
    // Predicated region
    $region10: #{_fused_identity_decode.1} parent=1 // pred_check
      _
    $region11: #{_fused_identity_decode.1} parent=1 // pred_check_branch
      %27 = sbr.rel (0) target = $region13
    $region12: #{_fused_identity_decode.1} parent=1 // pred_region
      %28 = dma.done [#allocation3], 2048
    $region13: #{_fused_identity_decode.1} parent=1 // pred_fallthru
      _
    %v29 = vld [vmem:[#allocation2] sm:$0xff]
    %v30 = vld [vmem:[#allocation2 + $0x8] sm:$0xff]
    %v31 = vld [vmem:[#allocation2 + $0x10] sm:$0xff]
    %v32 = vld [vmem:[#allocation2 + $0x18] sm:$0xff]
    %v33 = vld [vmem:[#allocation2 + $0x20] sm:$0xff]
    %v34 = vld [vmem:[#allocation2 + $0x28] sm:$0xff]
    %v35 = vld [vmem:[#allocation2 + $0x30] sm:$0xff]
    %v36 = vld [vmem:[#allocation2 + $0x38] sm:$0xff]
    %v37 = vld [vmem:[#allocation2 + $0x40] sm:$0xff]
    %v38 = vld [vmem:[#allocation2 + $0x48] sm:$0xff]
    %v39 = vld [vmem:[#allocation2 + $0x50] sm:$0xff]
    %v40 = vld [vmem:[#allocation2 + $0x58] sm:$0xff]
    %v41 = vld [vmem:[#allocation2 + $0x60] sm:$0xff]
    %v42 = vld [vmem:[#allocation2 + $0x68] sm:$0xff]
    %v43 = vld [vmem:[#allocation2 + $0x70] sm:$0xff]
    %v44 = vld [vmem:[#allocation2 + $0x78] sm:$0xff]
    %vm45 = vcmask 130048
    %46 = vst.msk [vmem:[#allocation5] sm:$0xff] %vm45, %v29
    %47 = vst.msk [vmem:[#allocation5 + $0x8] sm:$0xff] %vm45, %v30
    %48 = vst.msk [vmem:[#allocation5 + $0x10] sm:$0xff] %vm45, %v31
    %49 = vst.msk [vmem:[#allocation5 + $0x18] sm:$0xff] %vm45, %v32
    %50 = vst.msk [vmem:[#allocation5 + $0x20] sm:$0xff] %vm45, %v33
    %51 = vst.msk [vmem:[#allocation5 + $0x28] sm:$0xff] %vm45, %v34
    %52 = vst.msk [vmem:[#allocation5 + $0x30] sm:$0xff] %vm45, %v35
    %53 = vst.msk [vmem:[#allocation5 + $0x38] sm:$0xff] %vm45, %v36
    %54 = vst.msk [vmem:[#allocation5 + $0x40] sm:$0xff] %vm45, %v37
    %55 = vst.msk [vmem:[#allocation5 + $0x48] sm:$0xff] %vm45, %v38
    %56 = vst.msk [vmem:[#allocation5 + $0x50] sm:$0xff] %vm45, %v39
    %57 = vst.msk [vmem:[#allocation5 + $0x58] sm:$0xff] %vm45, %v40
    %58 = vst.msk [vmem:[#allocation5 + $0x60] sm:$0xff] %vm45, %v41
    %59 = vst.msk [vmem:[#allocation5 + $0x68] sm:$0xff] %vm45, %v42
    %60 = vst.msk [vmem:[#allocation5 + $0x70] sm:$0xff] %vm45, %v43
    %61 = vst.msk [vmem:[#allocation5 + $0x78] sm:$0xff] %vm45, %v44
    %v62 = vld [vmem:[%s1] sm:$0x3]
    %vm63 = vcmask 254976
    %64 = vst.msk [vmem:[#allocation6] sm:$0x3] %vm63, %v62
    // Predicated region
    $region14: #{_fused_identity_decode.1} parent=1 // pred_check
      _
    $region15: #{_fused_identity_decode.1} parent=1 // pred_check_branch
      %66 = sbr.rel (0) target = $region17
    $region16: #{_fused_identity_decode.1} parent=1 // pred_region
      %s68 = ssub.s32 2048, 2048
      %69 = vsyncadd [#allocation4], %s68
      %s70 = sshll.u32 [#allocation5], 4
      %s71 = int_to_ptr.vmem [resolvable:$true] %s70
      %76 = dma.vmem_to_hbm [thread:$0]  %s71, 2048, %s2, [#allocation4], 128, 128, 8
    $region17: #{_fused_identity_decode.1} parent=1 // pred_fallthru
      _
    // Predicated region
    $region18: #{_fused_identity_decode.1} parent=1 // pred_check
      _
    $region19: #{_fused_identity_decode.1} parent=1 // pred_check_branch
      %78 = sbr.rel (0) target = $region21
    $region20: #{_fused_identity_decode.1} parent=1 // pred_region
      %s80 = ssub.s32 32, 32
      %81 = vsyncadd [#allocation7], %s80
      %s83 = sshll.u32 [#allocation6], 4
      %s84 = int_to_ptr.vmem [resolvable:$true] %s83
      %86 = dma.vmem_to_hbm [thread:$0]  %s84, 32, %s3, [#allocation7]
    $region21: #{_fused_identity_decode.1} parent=1 // pred_fallthru
      _
    // Predicated region
    $region22: #{_fused_identity_decode.1} parent=1 // pred_check
      _
    $region23: #{_fused_identity_decode.1} parent=1 // pred_check_branch
      %88 = sbr.rel (0) target = $region25
    $region24: #{_fused_identity_decode.1} parent=1 // pred_region
      %89 = dma.done [#allocation4], 2048
    $region25: #{_fused_identity_decode.1} parent=1 // pred_fallthru
      _
    // Predicated region
    $region26: #{_fused_identity_decode.1} parent=1 // pred_check
      _
    $region27: #{_fused_identity_decode.1} parent=1 // pred_check_branch
      %91 = sbr.rel (0) target = $region29
    $region28: #{_fused_identity_decode.1} parent=1 // pred_region
      %92 = dma.done [#allocation7], 32
    $region29: #{_fused_identity_decode.1} parent=1 // pred_fallthru
      _
    %93 = vsyncpa [#allocation3], 1
    %94 = vsyncpa [#allocation4], 1
    %95 = vsyncpa [#allocation7], 1

</llo_original>
